<compile_context>
chip_gen: v5e
topology: v5e:2x2
jax: 0.10.0
libtpu: 0.0.40
codegen_flags: <defaults>
</compile_context>

<pallas_src>
import jax
import jax.numpy as jnp
from jax.experimental import pallas as pl
from jax.experimental.pallas import tpu as pltpu

HIDDEN_DIM = 128
LATENT_DIM = 8
INPUT_DIM = 16
LANES = 128

BATCH = 64          # demo total rows
TILE_ROWS = 32      # rows per grid step (multiple of 8)

# ---- packed parameter blob: 128 lanes wide, all row offsets 8-aligned ----
ROW_W_ENC_I = 0                         # (D, H)   encoder i-gate  W_ih^T
ROW_W_ENC_G = 16                        # (D, H)   encoder g-gate
ROW_W_ENC_O = 32                        # (D, H)   encoder o-gate
ROW_B_ENC_I = 48                        # row 48:  (1, H)
ROW_B_ENC_G = 56
ROW_B_ENC_O = 64
ROW_W_HEAD_T = 72                       # (2L, H): rows [72:80)=w_mu^T, [80:88)=w_logvar^T
ROW_B_HEAD = 88                         # row 88:  lanes [0:L)=b_mu, [L:2L)=b_logvar
ROW_W_DEC_I = 96                        # (L, 128) real cols [0:D)  (decoder_l1 folded in)
ROW_W_DEC_G = 104
ROW_W_DEC_O = 112
ROW_B_DEC_I = 120                       # row 120: lanes [0:D)
ROW_B_DEC_G = 128
ROW_B_DEC_O = 136
N_ROWS = 144                            # 144 x 128 x 4 B ~= 72 KB

# ---- input slab lanes (one (N, 128) slab) ----
IN_WIDTH = LANES                        # x in [0:D), eps in [D:D+L), zeros elsewhere

# ---- output slab lanes (one (N, 256) slab) ----
OUT_WIDTH = 2 * LANES
OUT_RECON = 0                           # group 0, lanes [0:D)
OUT_MU = LANES                          # group 1, lanes [0:L)
OUT_LOGVAR = LANES + LATENT_DIM         # group 1, lanes [L:2L)


def vae_kernel(xe_ref, p_ref, out_ref):
    D, H, L = INPUT_DIM, HIDDEN_DIM, LATENT_DIM
    bt = xe_ref.shape[0]

    x = xe_ref[:, 0:D]                                       # (bt, D)
    eps = xe_ref[:, D:D + L]                                  # (bt, L)

    # ---- encoder LSTM (single step, zero init state, f-gate pre-dropped) ----
    # One (D,128) weight block + one bias row per gate -> full-vreg gate math.
    def enc_gate(row_w, row_b):
        w = p_ref[row_w:row_w + D, :]                         # (D, 128)
        b = p_ref[row_b:row_b + 1, :]                         # (1, 128)
        return jnp.dot(x, w, preferred_element_type=jnp.float32) + b

    gi = enc_gate(ROW_W_ENC_I, ROW_B_ENC_I)
    gg = enc_gate(ROW_W_ENC_G, ROW_B_ENC_G)
    go = enc_gate(ROW_W_ENC_O, ROW_B_ENC_O)
    h_e = jax.nn.sigmoid(go) * jnp.tanh(jax.nn.sigmoid(gi) * jnp.tanh(gg))  # (bt, H)

    # ---- fused mu/logvar heads: transposed (2L, H) block, rhs-T contraction ----
    w_head_t = p_ref[ROW_W_HEAD_T:ROW_W_HEAD_T + 2 * L, :]    # (2L, H)
    heads = jax.lax.dot_general(h_e, w_head_t, (((1,), (1,)), ((), ())),
                                preferred_element_type=jnp.float32)          # (bt, 2L)
    heads = heads + p_ref[ROW_B_HEAD:ROW_B_HEAD + 1, 0:2 * L]                # [mu | logvar]

    # ---- reparameterization: z = mu + eps * exp(0.5 * logvar) ----
    mu = heads[:, 0:L]
    logvar = heads[:, L:2 * L]
    z = mu + eps * jnp.exp(0.5 * logvar)                                     # (bt, L)

    # ---- decoder: Linear folded into decoder-LSTM input projection ----
    # (L,128) weight blocks, real cols [0:D); padding lanes self-cancel to 0.
    def dec_gate(row_w, row_b):
        w = p_ref[row_w:row_w + L, :]                         # (L, 128)
        b = p_ref[row_b:row_b + 1, :]                         # (1, 128)
        return jnp.dot(z, w, preferred_element_type=jnp.float32) + b

    di = dec_gate(ROW_W_DEC_I, ROW_B_DEC_I)
    dg = dec_gate(ROW_W_DEC_G, ROW_B_DEC_G)
    do = dec_gate(ROW_W_DEC_O, ROW_B_DEC_O)
    recon = jax.nn.sigmoid(do) * jnp.tanh(jax.nn.sigmoid(di) * jnp.tanh(dg))  # (bt, 128)

    # ---- lane-dense output: two aligned full-vreg-group stores ----
    out_ref[:, 0:LANES] = recon                               # recon at lanes [0:D), zeros beyond
    out_ref[:, LANES:2 * LANES] = jnp.concatenate(
        [heads, jnp.zeros((bt, LANES - 2 * L), jnp.float32)], axis=1)


def vae_forward(x, eps, packed_params, *, tile_rows=TILE_ROWS):
    """Full VAE forward; grid over row tiles, params VMEM-resident across the grid."""
    n = x.shape[0]
    assert n % tile_rows == 0 and tile_rows % 8 == 0
    assert packed_params.shape == (N_ROWS, LANES)

    # One lane-dense input slab: x in lanes [0:D), eps in lanes [D:D+L).
    xe = jnp.zeros((n, IN_WIDTH), jnp.float32)
    xe = xe.at[:, 0:INPUT_DIM].set(x.astype(jnp.float32))
    xe = xe.at[:, INPUT_DIM:INPUT_DIM + LATENT_DIM].set(eps.astype(jnp.float32))

    flops = 2 * n * (3 * INPUT_DIM * HIDDEN_DIM
                     + HIDDEN_DIM * 2 * LATENT_DIM
                     + 3 * LATENT_DIM * INPUT_DIM)
    transcendentals = n * (4 * HIDDEN_DIM + LATENT_DIM + 4 * INPUT_DIM)
    bytes_accessed = 4 * (xe.size + packed_params.size + n * OUT_WIDTH)

    out = pl.pallas_call(
        vae_kernel,
        out_shape=jax.ShapeDtypeStruct((n, OUT_WIDTH), jnp.float32),
        grid=(n // tile_rows,),
        in_specs=[
            pl.BlockSpec((tile_rows, IN_WIDTH), lambda i: (i, 0)),
            # constant index_map -> param blob DMA'd once, stays VMEM-resident
            pl.BlockSpec((N_ROWS, LANES), lambda i: (0, 0)),
        ],
        out_specs=pl.BlockSpec((tile_rows, OUT_WIDTH), lambda i: (i, 0)),
        compiler_params=pltpu.CompilerParams(
            dimension_semantics=("parallel",),      # shards row tiles across v7x's 2 TCs
            vmem_limit_bytes=4 * 1024 * 1024,
        ),
        cost_estimate=pl.CostEstimate(flops=flops,
                                      transcendentals=transcendentals,
                                      bytes_accessed=bytes_accessed),
    )(xe, packed_params)

    recon = out[:, OUT_RECON:OUT_RECON + INPUT_DIM]
    mu = out[:, OUT_MU:OUT_MU + LATENT_DIM]
    logvar = out[:, OUT_LOGVAR:OUT_LOGVAR + LATENT_DIM]
    return recon, mu, logvar


def init_params(key):
    """Synthetic model parameters with PyTorch-equivalent shapes
    (weights pre-transposed to (in, out); LSTM biases b_ih + b_hh pre-summed,
    full 4-gate [i, f, g, o] layout — prepare_packed_params does the fusions)."""
    ks = jax.random.split(key, 10)
    u = lambda k, shape, s: jax.random.uniform(k, shape, jnp.float32, -s, s)
    s_enc = 1.0 / jnp.sqrt(HIDDEN_DIM)
    s_lat = 1.0 / jnp.sqrt(LATENT_DIM)
    s_dec = 1.0 / jnp.sqrt(INPUT_DIM)

    w_enc = u(ks[0], (INPUT_DIM, 4 * HIDDEN_DIM), s_enc)   # encoder LSTM W_ih^T
    b_enc = u(ks[1], (1, 4 * HIDDEN_DIM), s_enc)           # b_ih + b_hh
    w_mu = u(ks[2], (HIDDEN_DIM, LATENT_DIM), s_enc)
    b_mu = u(ks[3], (1, LATENT_DIM), s_enc)
    w_lv = u(ks[4], (HIDDEN_DIM, LATENT_DIM), s_enc)
    b_lv = u(ks[5], (1, LATENT_DIM), s_enc)
    w_d1 = u(ks[6], (LATENT_DIM, HIDDEN_DIM), s_lat)
    b_d1 = u(ks[7], (1, HIDDEN_DIM), s_lat)
    w_dec = u(ks[8], (HIDDEN_DIM, 4 * INPUT_DIM), s_dec)   # decoder LSTM W_ih^T
    b_dec = u(ks[9], (1, 4 * INPUT_DIM), s_dec)            # b_ih + b_hh
    return (w_enc, b_enc, w_mu, b_mu, w_lv, b_lv, w_d1, b_d1, w_dec, b_dec)


def prepare_packed_params(params):
    """Offline fusions + packing into one compact 128-lane-wide VMEM blob."""
    (w_enc, b_enc, w_mu, b_mu, w_lv, b_lv, w_d1, b_d1, w_dec, b_dec) = params
    H, L, D = HIDDEN_DIM, LATENT_DIM, INPUT_DIM

    buf = jnp.zeros((N_ROWS, LANES), jnp.float32)

    # encoder LSTM gates (PyTorch order [i, f, g, o]; f-gate dropped: c0 == 0)
    buf = buf.at[ROW_W_ENC_I:ROW_W_ENC_I + D, :].set(w_enc[:, 0:H])
    buf = buf.at[ROW_W_ENC_G:ROW_W_ENC_G + D, :].set(w_enc[:, 2 * H:3 * H])
    buf = buf.at[ROW_W_ENC_O:ROW_W_ENC_O + D, :].set(w_enc[:, 3 * H:4 * H])
    buf = buf.at[ROW_B_ENC_I, :].set(b_enc[0, 0:H])
    buf = buf.at[ROW_B_ENC_G, :].set(b_enc[0, 2 * H:3 * H])
    buf = buf.at[ROW_B_ENC_O, :].set(b_enc[0, 3 * H:4 * H])

    # fused mu/logvar heads, stored TRANSPOSED as (2L, H)
    buf = buf.at[ROW_W_HEAD_T:ROW_W_HEAD_T + L, :].set(w_mu.T)
    buf = buf.at[ROW_W_HEAD_T + L:ROW_W_HEAD_T + 2 * L, :].set(w_lv.T)
    buf = buf.at[ROW_B_HEAD, 0:L].set(b_mu[0])
    buf = buf.at[ROW_B_HEAD, L:2 * L].set(b_lv[0])

    # decoder: Linear folded into decoder-LSTM input projection; f-gate dropped
    w_df = w_d1 @ w_dec                   # (L, 4D)
    b_df = b_d1 @ w_dec + b_dec           # (1, 4D)
    buf = buf.at[ROW_W_DEC_I:ROW_W_DEC_I + L, 0:D].set(w_df[:, 0:D])
    buf = buf.at[ROW_W_DEC_G:ROW_W_DEC_G + L, 0:D].set(w_df[:, 2 * D:3 * D])
    buf = buf.at[ROW_W_DEC_O:ROW_W_DEC_O + L, 0:D].set(w_df[:, 3 * D:4 * D])
    buf = buf.at[ROW_B_DEC_I, 0:D].set(b_df[0, 0:D])
    buf = buf.at[ROW_B_DEC_G, 0:D].set(b_df[0, 2 * D:3 * D])
    buf = buf.at[ROW_B_DEC_O, 0:D].set(b_df[0, 3 * D:4 * D])
    return buf


def vae_reference(x, eps, params):
    """Pure-jnp reference of the UNFUSED model math (full 4-gate LSTM, separate
    decoder Linear + LSTM, separate mu/logvar heads) for correctness checking."""
    (w_enc, b_enc, w_mu, b_mu, w_lv, b_lv, w_d1, b_d1, w_dec, b_dec) = params

    def lstm_step(g, n):
        i = jax.nn.sigmoid(g[:, 0:n])
        f = jax.nn.sigmoid(g[:, n:2 * n])
        gg = jnp.tanh(g[:, 2 * n:3 * n])
        o = jax.nn.sigmoid(g[:, 3 * n:4 * n])
        c = f * 0.0 + i * gg              # c0 == 0
        return o * jnp.tanh(c)

    h_e = lstm_step(x @ w_enc + b_enc, HIDDEN_DIM)
    mu = h_e @ w_mu + b_mu
    logvar = h_e @ w_lv + b_lv
    z = mu + eps * jnp.exp(0.5 * logvar)
    d1 = z @ w_d1 + b_d1
    recon = lstm_step(d1 @ w_dec + b_dec, INPUT_DIM)
    return recon, mu, logvar


if __name__ == "__main__":
    root = jax.random.PRNGKey(0)
    k_x, k_eps, k_params = jax.random.split(root, 3)

    x = jax.random.normal(k_x, (BATCH, INPUT_DIM), jnp.float32)
    # eps for the reparameterization trick (torch.randn_like equivalent) is drawn
    # deterministically here and fed to the kernel as an explicit input.
    eps = jax.random.normal(k_eps, (BATCH, LATENT_DIM), jnp.float32)

    params = init_params(k_params)
    packed = prepare_packed_params(params)

    recon, mu, logvar = jax.block_until_ready(
        vae_forward(x, eps, packed, tile_rows=TILE_ROWS))

    recon_ref, mu_ref, logvar_ref = vae_reference(x, eps, params)
    assert recon.shape == (BATCH, INPUT_DIM)
    assert mu.shape == (BATCH, LATENT_DIM) and logvar.shape == (BATCH, LATENT_DIM)
    assert jnp.allclose(recon, recon_ref, atol=1e-5, rtol=1e-5)
    assert jnp.allclose(mu, mu_ref, atol=1e-5, rtol=1e-5)
    assert jnp.allclose(logvar, logvar_ref, atol=1e-5, rtol=1e-5)

    print("KERNEL_OK")
</pallas_src>

<mosaic_0001>
module attributes {stable_mosaic.version = 11 : i64} {
  func.func @vae_kernel(%arg0: i32, %arg1: memref<32x128xf32, #tpu.memory_space<vmem>>, %arg2: memref<144x128xf32, #tpu.memory_space<vmem>>, %arg3: memref<32x256xf32, #tpu.memory_space<vmem>>) attributes {dimension_semantics = [#tpu.dimension_semantics<parallel>], iteration_bounds = array<i64: 2>, scalar_prefetch = 0 : i64, scratch_operands = 0 : i64, tpu.core_type = #tpu.core_type<tc>, window_params = [{transform_indices = @transform_0, window_bounds = array<i64: 32, 128>}, {pipeline_mode = #tpu.pipeline_mode<synchronous>, transform_indices = @transform_1, window_bounds = array<i64: 144, 128>}, {transform_indices = @transform_2, window_bounds = array<i64: 32, 256>}]} {
    %c0 = arith.constant 0 : index
    %c0_0 = arith.constant 0 : index
    %0 = vector.load %arg1[%c0, %c0_0] : memref<32x128xf32, #tpu.memory_space<vmem>>, vector<32x16xf32>
    %c0_1 = arith.constant 0 : index
    %c16 = arith.constant 16 : index
    %1 = vector.load %arg1[%c0_1, %c16] : memref<32x128xf32, #tpu.memory_space<vmem>>, vector<32x8xf32>
    %c0_2 = arith.constant 0 : index
    %c0_3 = arith.constant 0 : index
    %2 = vector.load %arg2[%c0_2, %c0_3] : memref<144x128xf32, #tpu.memory_space<vmem>>, vector<16x128xf32>
    %c48 = arith.constant 48 : index
    %c0_4 = arith.constant 0 : index
    %3 = vector.load %arg2[%c48, %c0_4] : memref<144x128xf32, #tpu.memory_space<vmem>>, vector<1x128xf32>
    %cst = arith.constant dense<0.000000e+00> : vector<32x128xf32>
    %4 = tpu.matmul %0, %2, %cst {dimension_numbers = #tpu.dot_dimension_numbers<[1], [0], [0], [1], [0, 0, 1, 1], [], []>} : vector<32x16xf32>, vector<16x128xf32>, vector<32x128xf32> -> vector<32x128xf32>
    %5 = vector.broadcast %3 : vector<1x128xf32> to vector<32x128xf32>
    %6 = arith.addf %4, %5 : vector<32x128xf32>
    %c16_5 = arith.constant 16 : index
    %c0_6 = arith.constant 0 : index
    %7 = vector.load %arg2[%c16_5, %c0_6] : memref<144x128xf32, #tpu.memory_space<vmem>>, vector<16x128xf32>
    %c56 = arith.constant 56 : index
    %c0_7 = arith.constant 0 : index
    %8 = vector.load %arg2[%c56, %c0_7] : memref<144x128xf32, #tpu.memory_space<vmem>>, vector<1x128xf32>
    %cst_8 = arith.constant dense<0.000000e+00> : vector<32x128xf32>
    %9 = tpu.matmul %0, %7, %cst_8 {dimension_numbers = #tpu.dot_dimension_numbers<[1], [0], [0], [1], [0, 0, 1, 1], [], []>} : vector<32x16xf32>, vector<16x128xf32>, vector<32x128xf32> -> vector<32x128xf32>
    %10 = vector.broadcast %8 : vector<1x128xf32> to vector<32x128xf32>
    %11 = arith.addf %9, %10 : vector<32x128xf32>
    %c32 = arith.constant 32 : index
    %c0_9 = arith.constant 0 : index
    %12 = vector.load %arg2[%c32, %c0_9] : memref<144x128xf32, #tpu.memory_space<vmem>>, vector<16x128xf32>
    %c64 = arith.constant 64 : index
    %c0_10 = arith.constant 0 : index
    %13 = vector.load %arg2[%c64, %c0_10] : memref<144x128xf32, #tpu.memory_space<vmem>>, vector<1x128xf32>
    %cst_11 = arith.constant dense<0.000000e+00> : vector<32x128xf32>
    %14 = tpu.matmul %0, %12, %cst_11 {dimension_numbers = #tpu.dot_dimension_numbers<[1], [0], [0], [1], [0, 0, 1, 1], [], []>} : vector<32x16xf32>, vector<16x128xf32>, vector<32x128xf32> -> vector<32x128xf32>
    %15 = vector.broadcast %13 : vector<1x128xf32> to vector<32x128xf32>
    %16 = arith.addf %14, %15 : vector<32x128xf32>
    %17 = arith.negf %16 : vector<32x128xf32>
    %18 = math.exp %17 : vector<32x128xf32>
    %cst_12 = arith.constant 1.000000e+00 : f32
    %19 = vector.broadcast %cst_12 : f32 to vector<32x128xf32>
    %20 = arith.addf %19, %18 : vector<32x128xf32>
    %21 = arith.divf %19, %20 : vector<32x128xf32>
    %22 = arith.negf %6 : vector<32x128xf32>
    %23 = math.exp %22 : vector<32x128xf32>
    %cst_13 = arith.constant 1.000000e+00 : f32
    %24 = vector.broadcast %cst_13 : f32 to vector<32x128xf32>
    %25 = arith.addf %24, %23 : vector<32x128xf32>
    %26 = arith.divf %24, %25 : vector<32x128xf32>
    %27 = math.tanh %11 : vector<32x128xf32>
    %28 = arith.mulf %26, %27 : vector<32x128xf32>
    %29 = math.tanh %28 : vector<32x128xf32>
    %30 = arith.mulf %21, %29 : vector<32x128xf32>
    %c72 = arith.constant 72 : index
    %c0_14 = arith.constant 0 : index
    %31 = vector.load %arg2[%c72, %c0_14] : memref<144x128xf32, #tpu.memory_space<vmem>>, vector<16x128xf32>
    %cst_15 = arith.constant dense<0.000000e+00> : vector<32x16xf32>
    %32 = tpu.matmul %30, %31, %cst_15 {dimension_numbers = #tpu.dot_dimension_numbers<[1], [1], [0], [0], [0, 0, 1, 0], [], []>} : vector<32x128xf32>, vector<16x128xf32>, vector<32x16xf32> -> vector<32x16xf32>
    %c88 = arith.constant 88 : index
    %c0_16 = arith.constant 0 : index
    %33 = vector.load %arg2[%c88, %c0_16] : memref<144x128xf32, #tpu.memory_space<vmem>>, vector<1x16xf32>
    %34 = vector.broadcast %33 : vector<1x16xf32> to vector<32x16xf32>
    %35 = arith.addf %32, %34 : vector<32x16xf32>
    %36 = vector.extract_strided_slice %35 {offsets = [0, 0], sizes = [32, 8], strides = [1, 1]} : vector<32x16xf32> to vector<32x8xf32>
    %37 = vector.extract_strided_slice %35 {offsets = [0, 8], sizes = [32, 8], strides = [1, 1]} : vector<32x16xf32> to vector<32x8xf32>
    %cst_17 = arith.constant 5.000000e-01 : f32
    %38 = vector.broadcast %cst_17 : f32 to vector<32x8xf32>
    %39 = arith.mulf %38, %37 : vector<32x8xf32>
    %40 = math.exp %39 : vector<32x8xf32>
    %41 = arith.mulf %1, %40 : vector<32x8xf32>
    %42 = arith.addf %36, %41 : vector<32x8xf32>
    %c96 = arith.constant 96 : index
    %c0_18 = arith.constant 0 : index
    %43 = vector.load %arg2[%c96, %c0_18] : memref<144x128xf32, #tpu.memory_space<vmem>>, vector<8x128xf32>
    %c120 = arith.constant 120 : index
    %c0_19 = arith.constant 0 : index
    %44 = vector.load %arg2[%c120, %c0_19] : memref<144x128xf32, #tpu.memory_space<vmem>>, vector<1x128xf32>
    %cst_20 = arith.constant dense<0.000000e+00> : vector<32x128xf32>
    %45 = tpu.matmul %42, %43, %cst_20 {dimension_numbers = #tpu.dot_dimension_numbers<[1], [0], [0], [1], [0, 0, 1, 1], [], []>} : vector<32x8xf32>, vector<8x128xf32>, vector<32x128xf32> -> vector<32x128xf32>
    %46 = vector.broadcast %44 : vector<1x128xf32> to vector<32x128xf32>
    %47 = arith.addf %45, %46 : vector<32x128xf32>
    %c104 = arith.constant 104 : index
    %c0_21 = arith.constant 0 : index
    %48 = vector.load %arg2[%c104, %c0_21] : memref<144x128xf32, #tpu.memory_space<vmem>>, vector<8x128xf32>
    %c128 = arith.constant 128 : index
    %c0_22 = arith.constant 0 : index
    %49 = vector.load %arg2[%c128, %c0_22] : memref<144x128xf32, #tpu.memory_space<vmem>>, vector<1x128xf32>
    %cst_23 = arith.constant dense<0.000000e+00> : vector<32x128xf32>
    %50 = tpu.matmul %42, %48, %cst_23 {dimension_numbers = #tpu.dot_dimension_numbers<[1], [0], [0], [1], [0, 0, 1, 1], [], []>} : vector<32x8xf32>, vector<8x128xf32>, vector<32x128xf32> -> vector<32x128xf32>
    %51 = vector.broadcast %49 : vector<1x128xf32> to vector<32x128xf32>
    %52 = arith.addf %50, %51 : vector<32x128xf32>
    %c112 = arith.constant 112 : index
    %c0_24 = arith.constant 0 : index
    %53 = vector.load %arg2[%c112, %c0_24] : memref<144x128xf32, #tpu.memory_space<vmem>>, vector<8x128xf32>
    %c136 = arith.constant 136 : index
    %c0_25 = arith.constant 0 : index
    %54 = vector.load %arg2[%c136, %c0_25] : memref<144x128xf32, #tpu.memory_space<vmem>>, vector<1x128xf32>
    %cst_26 = arith.constant dense<0.000000e+00> : vector<32x128xf32>
    %55 = tpu.matmul %42, %53, %cst_26 {dimension_numbers = #tpu.dot_dimension_numbers<[1], [0], [0], [1], [0, 0, 1, 1], [], []>} : vector<32x8xf32>, vector<8x128xf32>, vector<32x128xf32> -> vector<32x128xf32>
    %56 = vector.broadcast %54 : vector<1x128xf32> to vector<32x128xf32>
    %57 = arith.addf %55, %56 : vector<32x128xf32>
    %58 = arith.negf %57 : vector<32x128xf32>
    %59 = math.exp %58 : vector<32x128xf32>
    %cst_27 = arith.constant 1.000000e+00 : f32
    %60 = vector.broadcast %cst_27 : f32 to vector<32x128xf32>
    %61 = arith.addf %60, %59 : vector<32x128xf32>
    %62 = arith.divf %60, %61 : vector<32x128xf32>
    %63 = arith.negf %47 : vector<32x128xf32>
    %64 = math.exp %63 : vector<32x128xf32>
    %cst_28 = arith.constant 1.000000e+00 : f32
    %65 = vector.broadcast %cst_28 : f32 to vector<32x128xf32>
    %66 = arith.addf %65, %64 : vector<32x128xf32>
    %67 = arith.divf %65, %66 : vector<32x128xf32>
    %68 = math.tanh %52 : vector<32x128xf32>
    %69 = arith.mulf %67, %68 : vector<32x128xf32>
    %70 = math.tanh %69 : vector<32x128xf32>
    %71 = arith.mulf %62, %70 : vector<32x128xf32>
    %c0_29 = arith.constant 0 : index
    %c0_30 = arith.constant 0 : index
    %72 = vector.load %arg3[%c0_29, %c0_30] : memref<32x256xf32, #tpu.memory_space<vmem>>, vector<32x128xf32>
    tpu.vector_store %arg3[%c0_29, %c0_30], %71 {strides = array<i32>} : memref<32x256xf32, #tpu.memory_space<vmem>>, vector<32x128xf32>,
    %cst_31 = arith.constant 0.000000e+00 : f32
    %73 = vector.broadcast %cst_31 : f32 to vector<32x112xf32>
    %74 = tpu.concatenate %35, %73 in 1 : vector<32x16xf32>, vector<32x112xf32> -> vector<32x128xf32>
    %c0_32 = arith.constant 0 : index
    %c128_33 = arith.constant 128 : index
    %75 = vector.load %arg3[%c0_32, %c128_33] : memref<32x256xf32, #tpu.memory_space<vmem>>, vector<32x128xf32>
    tpu.vector_store %arg3[%c0_32, %c128_33], %74 {strides = array<i32>} : memref<32x256xf32, #tpu.memory_space<vmem>>, vector<32x128xf32>,
    return
  }
  func.func @transform_0(%arg0: i32) -> (i32, i32) {
    %c0_i32 = arith.constant 0 : i32
    %c0_i32_0 = arith.constant 0 : i32
    return %arg0, %c0_i32 : i32, i32
  }
  func.func @transform_1(%arg0: i32) -> (i32, i32) {
    %c0_i32 = arith.constant 0 : i32
    %c0_i32_0 = arith.constant 0 : i32
    %c0_i32_1 = arith.constant 0 : i32
    return %c0_i32, %c0_i32_0 : i32, i32
  }
  func.func @transform_2(%arg0: i32) -> (i32, i32) {
    %c0_i32 = arith.constant 0 : i32
    %c0_i32_0 = arith.constant 0 : i32
    return %arg0, %c0_i32 : i32, i32
  }
}

</mosaic_0001>

<llo_original>
// kernel: tpu_custom_call.1
$region0: #{tpu_custom_call.1}
  #allocation0 [shape = 'u32[]', space=smem, size = 0x4, offset = 0x4, fixed_abs, tag = 'smem constant byte address 0x4 - core index']
  #allocation1 [shape = 'u32[72,128]{1,0:T(1,128)}', space=vmem, size = 0x9000, scoped, tag = 'internal scratch']
  %s0 = inlined_call_operand.hbm [shape: f32[64,128], index: 0, kind: input, shape index: {}]
  %s1 = inlined_call_operand.hbm [shape: f32[144,128], index: 1, kind: input, shape index: {}]
  %s2 = inlined_call_operand.hbm [shape: f32[64,256], index: 2, kind: output, shape index: {}]
  %s3 = sld [smem:[#allocation0]]
  $region49: #{tpu_custom_call.1} parent=0
    _
  %s5 = ssub.s32 1, %s3
  %s6 = scalar_select 0, %s5, %s3
  $region1: #{tpu_custom_call.1} parent=0
    #allocation2 [shape = 'u8[32768]{0}', space=vmem, size = 0x8000, scoped, tag = 'input window, operand 0']
    #allocation3 [shape = 's32[2]{0}', space=sflag, size = 0x8, scoped, tag = 'scoped memory for tpu_custom_call.1']
    #allocation4 [shape = 's32[2]{0}', space=sflag, size = 0x8, scoped, tag = 'scoped memory for tpu_custom_call.1']
    #allocation5 [shape = 'u8[73728]{0}', space=vmem, size = 0x12000, scoped, tag = 'input window, operand 1, single buffered']
    #allocation6 [shape = 's32[1]{0}', space=sflag, size = 0x4, scoped, tag = 'scoped memory for tpu_custom_call.1']
    #allocation7 [shape = 'u8[65536]{0}', space=vmem, size = 0x10000, scoped, tag = 'output window, operand 0']
    %7 = vsyncpa [#allocation3], 0
    %s8 = scalar_lea.sflag [#allocation3], 1
    %9 = vsyncpa %s8, 0
    %10 = vsyncpa [#allocation6], 0
    %11 = vsyncpa [#allocation4], 0
    %s12 = scalar_lea.sflag [#allocation4], 1
    %13 = vsyncpa %s12, 0
    loop: start=0, step=1, limit=4
    $region2: #{tpu_custom_call.1} parent=1 // loop_pre_header
      _
    $region3: #{tpu_custom_call.1} parent=1 // loop_header
      %s15 = sphi 0, %s19
      %p16 = scmp.ge.s32.totalorder %s15, 4
      %s25 = sphi 0, %s27
      %s28 = sphi 0, %s25
      %s29 = sphi 0, %s28
      %s45 = sphi 0, %s29
      %s49 = sphi 0, %s49
      %s51 = sphi 0, %s49
      %s52 = sphi 0, %s51
      %s66 = sphi 0, %s52
      %s72 = sphi 0, %s74
      %s75 = sphi 0, %s72
      %s76 = sphi 0, %s75
      %s92 = sphi 0, %s76
    $region4: #{tpu_custom_call.1} parent=1 // loop_header_branch
      %18 = sbr.rel (%p16) target = $region8
    $region5: #{tpu_custom_call.1} parent=1 // loop_body
      %s20 = ssub.s32 %s15, 1
      %s21 = ssub.s32 %s15, 2
      %s22 = sadd.s32 %s15, 1
      %s23 = ssub.s32 %s15, %s22
      %p24 = scmp.eq.s32.totalorder %s23, 0
      %s26 = sadd.s32 %s25, 1
      %s27 = scalar_select %p24, %s25, %s26
      %p30 = pneg %p24
      %p31 = scmp.eq.s32.totalorder %s15, 1
      %p32 = por %p30, %p31
      %p33 = scmp.ne.s32.totalorder %s25, %s28
      %p34 = scmp.eq.s32.totalorder %s15, 0
      %p35 = por %p33, %p34
      %p36 = scmp.ne.s32.totalorder %s25, %s28
      %p37 = scmp.eq.s32.totalorder %s20, 1
      %p38 = por %p36, %p37
      %p39 = scmp.ne.s32.totalorder %s28, %s29
      %p40 = scmp.eq.s32.totalorder %s20, 0
      %p41 = por %p39, %p40
      %p42 = scmp.ne.s32.totalorder %s28, %s29
      %p43 = scmp.eq.s32.totalorder %s21, 1
      %p44 = por %p42, %p43
      %p46 = scmp.ne.s32.totalorder %s29, %s45
      %p47 = scmp.eq.s32.totalorder %s21, 0
      %p48 = por %p46, %p47
      %s50 = sadd.s32 %s49, 1
      %p53 = scmp.eq.s32.totalorder %s15, 1
      %p54 = scmp.ne.s32.totalorder %s49, %s51
      %p55 = scmp.eq.s32.totalorder %s15, 0
      %p56 = por %p54, %p55
      %p57 = scmp.ne.s32.totalorder %s49, %s51
      %p58 = scmp.eq.s32.totalorder %s20, 1
      %p59 = por %p57, %p58
      %p60 = scmp.ne.s32.totalorder %s51, %s52
      %p61 = scmp.eq.s32.totalorder %s20, 0
      %p62 = por %p60, %p61
      %p63 = scmp.ne.s32.totalorder %s51, %s52
      %p64 = scmp.eq.s32.totalorder %s21, 1
      %p65 = por %p63, %p64
      %p67 = scmp.ne.s32.totalorder %s52, %s66
      %p68 = scmp.eq.s32.totalorder %s21, 0
      %p69 = por %p67, %p68
      %s70 = ssub.s32 %s15, %s22
      %p71 = scmp.eq.s32.totalorder %s70, 0
      %s73 = sadd.s32 %s72, 1
      %s74 = scalar_select %p71, %s72, %s73
      %p77 = pneg %p71
      %p78 = scmp.eq.s32.totalorder %s15, 1
      %p79 = por %p77, %p78
      %p80 = scmp.ne.s32.totalorder %s72, %s75
      %p81 = scmp.eq.s32.totalorder %s15, 0
      %p82 = por %p80, %p81
      %p83 = scmp.ne.s32.totalorder %s72, %s75
      %p84 = scmp.eq.s32.totalorder %s20, 1
      %p85 = por %p83, %p84
      %p86 = scmp.ne.s32.totalorder %s75, %s76
      %p87 = scmp.eq.s32.totalorder %s20, 0
      %p88 = por %p86, %p87
      %p89 = scmp.ne.s32.totalorder %s75, %s76
      %p90 = scmp.eq.s32.totalorder %s21, 1
      %p91 = por %p89, %p90
      %p93 = scmp.ne.s32.totalorder %s76, %s92
      %p94 = scmp.eq.s32.totalorder %s21, 0
      %p95 = por %p93, %p94
      %p96 = scmp.le.s32.totalorder 1, %s15
      %p97 = scmp.lt.s32.totalorder %s15, 3
      %p98 = pnand %p96, %p97
      %p99 = pneg %p98
      // Predicated region
      $region9: #{tpu_custom_call.1} parent=5 // pred_check
        _
      $region10: #{tpu_custom_call.1} parent=5 // pred_check_branch
        %101 = sbr.rel (%p98) target = $region12
      $region11: #{tpu_custom_call.1} parent=5 // pred_region
        %s102 = ssub.s32 %s15, 1
        // Predicated region
        $region13: #{tpu_custom_call.1} parent=11 // pred_check
          %p103 = pneg %p62
        $region14: #{tpu_custom_call.1} parent=11 // pred_check_branch
          %105 = sbr.rel (%p103) target = $region16
        $region15: #{tpu_custom_call.1} parent=11 // pred_region
          %107 = vsyncadd [#allocation6], 0
          %s108 = sshll.u32 %s1, 4
          %s109 = int_to_ptr.hbm [resolvable:$true] %s108
          %s110 = sshll.u32 [#allocation5], 4
          %s111 = int_to_ptr.vmem [resolvable:$true] %s110
          %116 = dma.hbm_to_vmem [thread:$0]  %s109, 2304, %s111, [#allocation6], 128, 128, 8
        $region16: #{tpu_custom_call.1} parent=11 // pred_fallthru
          _
      $region12: #{tpu_custom_call.1} parent=5 // pred_fallthru
        _
      %p117 = scmp.lt.s32.totalorder %s15, 2
      // Predicated region
      $region17: #{tpu_custom_call.1} parent=5 // pred_check
        %p118 = pneg %p117
      $region18: #{tpu_custom_call.1} parent=5 // pred_check_branch
        %120 = sbr.rel (%p118) target = $region20
      $region19: #{tpu_custom_call.1} parent=5 // pred_region
        // Predicated region
        $region21: #{tpu_custom_call.1} parent=19 // pred_check
          %p121 = pneg %p35
        $region22: #{tpu_custom_call.1} parent=19 // pred_check_branch
          %123 = sbr.rel (%p121) target = $region24
        $region23: #{tpu_custom_call.1} parent=19 // pred_region
          %s124 = sand.u32 %s25, 1
          %s125 = scalar_lea.sflag [#allocation3], %s124
          %s126 = sand.u32 %s25, 1
          %s127 = smul.addr %s126, 32
          %s128 = scalar_lea.vmem [#allocation2], %s127
          %s129 = smul.u32 4, %s15
          %131 = vsyncadd %s125, 0
          %s132 = smul.addr %s129, 8
          %s133 = scalar_lea.hbm %s0, %s132
          %s134 = sshll.u32 %s133, 4
          %s135 = int_to_ptr.hbm [resolvable:$true] %s134
          %s136 = sshll.u32 %s128, 4
          %s137 = int_to_ptr.vmem [resolvable:$true] %s136
          %142 = dma.hbm_to_vmem [thread:$0]  %s135, 512, %s137, %s125, 128, 128, 8
        $region24: #{tpu_custom_call.1} parent=19 // pred_fallthru
          _
      $region20: #{tpu_custom_call.1} parent=5 // pred_fallthru
        _
      %p143 = scmp.le.s32.totalorder 1, %s15
      %p144 = scmp.lt.s32.totalorder %s15, 3
      %p145 = pnand %p143, %p144
      %p146 = pneg %p145
      // Predicated region
      $region25: #{tpu_custom_call.1} parent=5 // pred_check
        _
      $region26: #{tpu_custom_call.1} parent=5 // pred_check_branch
        %148 = sbr.rel (%p145) target = $region28
      $region27: #{tpu_custom_call.1} parent=5 // pred_region
        %s149 = ssub.s32 %s15, 1
        %s150 = sand.u32 %s28, 1
        %s151 = scalar_lea.sflag [#allocation3], %s150
        %s152 = sand.u32 %s28, 1
        %s153 = smul.addr %s152, 32
        %s154 = scalar_lea.vmem [#allocation2], %s153
        // Predicated region
        $region29: #{tpu_custom_call.1} parent=27 // pred_check
          %p155 = pneg %p41
        $region30: #{tpu_custom_call.1} parent=27 // pred_check_branch
          %157 = sbr.rel (%p155) target = $region32
        $region31: #{tpu_custom_call.1} parent=27 // pred_region
          %159 = dma.done %s151, 512
        $region32: #{tpu_custom_call.1} parent=27 // pred_fallthru
          _
        // Predicated region
        $region33: #{tpu_custom_call.1} parent=27 // pred_check
          %p160 = pneg %p62
        $region34: #{tpu_custom_call.1} parent=27 // pred_check_branch
          %162 = sbr.rel (%p160) target = $region36
        $region35: #{tpu_custom_call.1} parent=27 // pred_region
          %164 = dma.done [#allocation6], 2304
        $region36: #{tpu_custom_call.1} parent=27 // pred_fallthru
          _
        %s165 = sand.u32 %s28, 1
        %s166 = scalar_lea.sflag [#allocation3], %s165
        %s167 = sand.u32 %s28, 1
        %s168 = smul.addr %s167, 32
        %s169 = scalar_lea.vmem [#allocation2], %s168
        %p170 = pneg %p41
        %p171 = pneg %p38
        %p172 = pneg %p62
        %p173 = pneg %p59
        %p174 = pneg %p88
        %p175 = pneg %p85
        %s176 = sand.u32 %s75, 1
        %s177 = scalar_lea.sflag [#allocation4], %s176
        %s178 = sand.u32 %s75, 1
        %s179 = smul.addr %s178, 64
        %s180 = scalar_lea.vmem [#allocation7], %s179
        %s181 = smul.u32 4, %s20
        %s182 = smul.u32 4, %s20
        %v183 = vld [vmem:[%s154] sm:$0xff]
        %v184 = vld [vmem:[%s154 + $0x8] sm:$0xff]
        %v185 = vld [vmem:[%s154 + $0x10] sm:$0xff]
        %v186 = vld [vmem:[%s154 + $0x18] sm:$0xff]
        %v187 = vld [vmem:[#allocation5] sm:$0xff]
        %v188 = vld [vmem:[#allocation5 + $0x8] sm:$0xff]
        %v189 = vld [vmem:[#allocation5 + $0x30] sm:$0x1]
        %v190 = vperm.slane %v189, 0
        %vm191 = vcmask 130048
        %v193 = vsel %vm191, %v183, 0
        %v196 = vsel %vm191, %v184, 0
        %v199 = vsel %vm191, %v185, 0
        %v202 = vsel %vm191, %v186, 0
        %204 = vmatpush.msra.mxu0 0.0
        %205 = vmatpush.msra.mxu0 0.0
        %206 = vmatpush.msra.mxu0 0.0
        %207 = vmatpush.msra.mxu0 0.0
        %208 = vmatpush.msra.mxu0 0.0
        %209 = vmatpush.msra.mxu0 0.0
        %210 = vmatpush.msra.mxu0 0.0
        %211 = vmatpush.msra.mxu0 0.0
        %212 = vmatpush.msra.mxu0 0.0
        %213 = vmatpush.msra.mxu0 0.0
        %214 = vmatpush.msra.mxu0 0.0
        %215 = vmatpush.msra.mxu0 0.0
        %216 = vmatpush.msra.mxu0 0.0
        %217 = vmatpush.msra.mxu0 0.0
        %218 = vmatpush.msra.mxu0 %v188
        %219 = vmatpush.msra.mxu0 %v187
        %220 = vmatmul.f32.gmra.mxu0 %v193
        %v221 = vpop.f32.mrf.mxu0
        %v222 = vadd.f32 %v190, %v221
        %223 = vmatmul.f32.gmra.mxu0 %v196
        %v224 = vpop.f32.mrf.mxu0
        %v225 = vadd.f32 %v190, %v224
        %226 = vmatmul.f32.gmra.mxu0 %v199
        %v227 = vpop.f32.mrf.mxu0
        %v228 = vadd.f32 %v190, %v227
        %229 = vmatmul.f32.gmra.mxu0 %v202
        %v230 = vpop.f32.mrf.mxu0
        %v231 = vadd.f32 %v190, %v230
        %232 = vdwg.mxu0
        %v233 = vld [vmem:[#allocation5 + $0x10] sm:$0xff]
        %v234 = vld [vmem:[#allocation5 + $0x18] sm:$0xff]
        %v235 = vld [vmem:[#allocation5 + $0x38] sm:$0x1]
        %v236 = vperm.slane %v235, 0
        %237 = vmatpush.msra.mxu0 0.0
        %238 = vmatpush.msra.mxu0 0.0
        %239 = vmatpush.msra.mxu0 0.0
        %240 = vmatpush.msra.mxu0 0.0
        %241 = vmatpush.msra.mxu0 0.0
        %242 = vmatpush.msra.mxu0 0.0
        %243 = vmatpush.msra.mxu0 0.0
        %244 = vmatpush.msra.mxu0 0.0
        %245 = vmatpush.msra.mxu0 0.0
        %246 = vmatpush.msra.mxu0 0.0
        %247 = vmatpush.msra.mxu0 0.0
        %248 = vmatpush.msra.mxu0 0.0
        %249 = vmatpush.msra.mxu0 0.0
        %250 = vmatpush.msra.mxu0 0.0
        %251 = vmatpush.msra.mxu0 %v234
        %252 = vmatpush.msra.mxu0 %v233
        %253 = vmatmul.f32.gmra.mxu0 %v193
        %v254 = vpop.f32.mrf.mxu0
        %v255 = vadd.f32 %v236, %v254
        %256 = vmatmul.f32.gmra.mxu0 %v196
        %v257 = vpop.f32.mrf.mxu0
        %v258 = vadd.f32 %v236, %v257
        %259 = vmatmul.f32.gmra.mxu0 %v199
        %v260 = vpop.f32.mrf.mxu0
        %v261 = vadd.f32 %v236, %v260
        %262 = vmatmul.f32.gmra.mxu0 %v202
        %v263 = vpop.f32.mrf.mxu0
        %v264 = vadd.f32 %v236, %v263
        %265 = vdwg.mxu0
        %v266 = vld [vmem:[#allocation5 + $0x20] sm:$0xff]
        %v267 = vld [vmem:[#allocation5 + $0x28] sm:$0xff]
        %v268 = vld [vmem:[#allocation5 + $0x40] sm:$0x1]
        %v269 = vperm.slane %v268, 0
        %270 = vmatpush.msra.mxu0 0.0
        %271 = vmatpush.msra.mxu0 0.0
        %272 = vmatpush.msra.mxu0 0.0
        %273 = vmatpush.msra.mxu0 0.0
        %274 = vmatpush.msra.mxu0 0.0
        %275 = vmatpush.msra.mxu0 0.0
        %276 = vmatpush.msra.mxu0 0.0
        %277 = vmatpush.msra.mxu0 0.0
        %278 = vmatpush.msra.mxu0 0.0
        %279 = vmatpush.msra.mxu0 0.0
        %280 = vmatpush.msra.mxu0 0.0
        %281 = vmatpush.msra.mxu0 0.0
        %282 = vmatpush.msra.mxu0 0.0
        %283 = vmatpush.msra.mxu0 0.0
        %284 = vmatpush.msra.mxu0 %v267
        %285 = vmatpush.msra.mxu0 %v266
        %286 = vmatmul.f32.gmra.mxu0 %v193
        %v287 = vpop.f32.mrf.mxu0
        %v288 = vadd.f32 %v269, %v287
        %289 = vmatmul.f32.gmra.mxu0 %v196
        %v290 = vpop.f32.mrf.mxu0
        %v291 = vadd.f32 %v269, %v290
        %292 = vmatmul.f32.gmra.mxu0 %v199
        %v293 = vpop.f32.mrf.mxu0
        %v294 = vadd.f32 %v269, %v293
        %295 = vmatmul.f32.gmra.mxu0 %v202
        %v296 = vpop.f32.mrf.mxu0
        %v297 = vadd.f32 %v269, %v296
        %298 = vdwg.mxu0
        %v299 = vxor.u32 %v288, 2147483648
        %v300 = vxor.u32 %v291, 2147483648
        %v301 = vxor.u32 %v294, 2147483648
        %v302 = vxor.u32 %v297, 2147483648
        %v303 = vmul.f32 %v299, 1.442695
        %v304 = vpow.pop %v303
        %v305 = vmul.f32 %v300, 1.442695
        %v306 = vpow.pop %v305
        %v307 = vmul.f32 %v301, 1.442695
        %v308 = vpow.pop %v307
        %v309 = vmul.f32 %v302, 1.442695
        %v310 = vpow.pop %v309
        %v311 = vadd.f32 %v304, 1.0
        %v312 = vadd.f32 %v306, 1.0
        %v313 = vadd.f32 %v308, 1.0
        %v314 = vadd.f32 %v310, 1.0
        %v315 = vrcp.pop %v311
        %v316 = vmul.f32 %v311, %v315
        %v317 = vsub.f32 1.0, %v316
        %v318 = vmul.f32 %v315, %v317
        %v319 = vadd.f32 %v315, %v318
        %vm320 = vweird.f32 %v311
        %vm321 = vweird.f32 %v315
        %vm322 = vmor %vm320, %vm321
        %v323 = vsel %vm322, %v315, %v319
        %v324 = vand.u32 2147483647, %v311
        %vm325 = vcmp.eq.f32.partialorder %v324, 8.507059e+37
        %v326 = vand.u32 %v311, 2147483648
        %v327 = vor.u32 1.1754944e-38, %v326
        %v328 = vsel %vm325, %v327, %v323
        %v329 = vmul.f32 1.0, %v328
        %v330 = vrcp.pop %v312
        %v331 = vmul.f32 %v312, %v330
        %v332 = vsub.f32 1.0, %v331
        %v333 = vmul.f32 %v330, %v332
        %v334 = vadd.f32 %v330, %v333
        %vm335 = vweird.f32 %v312
        %vm336 = vweird.f32 %v330
        %vm337 = vmor %vm335, %vm336
        %v338 = vsel %vm337, %v330, %v334
        %v339 = vand.u32 2147483647, %v312
        %vm340 = vcmp.eq.f32.partialorder %v339, 8.507059e+37
        %v341 = vand.u32 %v312, 2147483648
        %v342 = vor.u32 1.1754944e-38, %v341
        %v343 = vsel %vm340, %v342, %v338
        %v344 = vmul.f32 1.0, %v343
        %v345 = vrcp.pop %v313
        %v346 = vmul.f32 %v313, %v345
        %v347 = vsub.f32 1.0, %v346
        %v348 = vmul.f32 %v345, %v347
        %v349 = vadd.f32 %v345, %v348
        %vm350 = vweird.f32 %v313
        %vm351 = vweird.f32 %v345
        %vm352 = vmor %vm350, %vm351
        %v353 = vsel %vm352, %v345, %v349
        %v354 = vand.u32 2147483647, %v313
        %vm355 = vcmp.eq.f32.partialorder %v354, 8.507059e+37
        %v356 = vand.u32 %v313, 2147483648
        %v357 = vor.u32 1.1754944e-38, %v356
        %v358 = vsel %vm355, %v357, %v353
        %v359 = vmul.f32 1.0, %v358
        %v360 = vrcp.pop %v314
        %v361 = vmul.f32 %v314, %v360
        %v362 = vsub.f32 1.0, %v361
        %v363 = vmul.f32 %v360, %v362
        %v364 = vadd.f32 %v360, %v363
        %vm365 = vweird.f32 %v314
        %vm366 = vweird.f32 %v360
        %vm367 = vmor %vm365, %vm366
        %v368 = vsel %vm367, %v360, %v364
        %v369 = vand.u32 2147483647, %v314
        %vm370 = vcmp.eq.f32.partialorder %v369, 8.507059e+37
        %v371 = vand.u32 %v314, 2147483648
        %v372 = vor.u32 1.1754944e-38, %v371
        %v373 = vsel %vm370, %v372, %v368
        %v374 = vmul.f32 1.0, %v373
        %v375 = vxor.u32 %v222, 2147483648
        %v376 = vxor.u32 %v225, 2147483648
        %v377 = vxor.u32 %v228, 2147483648
        %v378 = vxor.u32 %v231, 2147483648
        %v379 = vmul.f32 %v375, 1.442695
        %v380 = vpow.pop %v379
        %v381 = vmul.f32 %v376, 1.442695
        %v382 = vpow.pop %v381
        %v383 = vmul.f32 %v377, 1.442695
        %v384 = vpow.pop %v383
        %v385 = vmul.f32 %v378, 1.442695
        %v386 = vpow.pop %v385
        %v387 = vadd.f32 %v380, 1.0
        %v388 = vadd.f32 %v382, 1.0
        %v389 = vadd.f32 %v384, 1.0
        %v390 = vadd.f32 %v386, 1.0
        %v391 = vrcp.pop %v387
        %v392 = vmul.f32 %v387, %v391
        %v393 = vsub.f32 1.0, %v392
        %v394 = vmul.f32 %v391, %v393
        %v395 = vadd.f32 %v391, %v394
        %vm396 = vweird.f32 %v387
        %vm397 = vweird.f32 %v391
        %vm398 = vmor %vm396, %vm397
        %v399 = vsel %vm398, %v391, %v395
        %v400 = vand.u32 2147483647, %v387
        %vm401 = vcmp.eq.f32.partialorder %v400, 8.507059e+37
        %v402 = vand.u32 %v387, 2147483648
        %v403 = vor.u32 1.1754944e-38, %v402
        %v404 = vsel %vm401, %v403, %v399
        %v405 = vmul.f32 1.0, %v404
        %v406 = vrcp.pop %v388
        %v407 = vmul.f32 %v388, %v406
        %v408 = vsub.f32 1.0, %v407
        %v409 = vmul.f32 %v406, %v408
        %v410 = vadd.f32 %v406, %v409
        %vm411 = vweird.f32 %v388
        %vm412 = vweird.f32 %v406
        %vm413 = vmor %vm411, %vm412
        %v414 = vsel %vm413, %v406, %v410
        %v415 = vand.u32 2147483647, %v388
        %vm416 = vcmp.eq.f32.partialorder %v415, 8.507059e+37
        %v417 = vand.u32 %v388, 2147483648
        %v418 = vor.u32 1.1754944e-38, %v417
        %v419 = vsel %vm416, %v418, %v414
        %v420 = vmul.f32 1.0, %v419
        %v421 = vrcp.pop %v389
        %v422 = vmul.f32 %v389, %v421
        %v423 = vsub.f32 1.0, %v422
        %v424 = vmul.f32 %v421, %v423
        %v425 = vadd.f32 %v421, %v424
        %vm426 = vweird.f32 %v389
        %vm427 = vweird.f32 %v421
        %vm428 = vmor %vm426, %vm427
        %v429 = vsel %vm428, %v421, %v425
        %v430 = vand.u32 2147483647, %v389
        %vm431 = vcmp.eq.f32.partialorder %v430, 8.507059e+37
        %v432 = vand.u32 %v389, 2147483648
        %v433 = vor.u32 1.1754944e-38, %v432
        %v434 = vsel %vm431, %v433, %v429
        %v435 = vmul.f32 1.0, %v434
        %v436 = vrcp.pop %v390
        %v437 = vmul.f32 %v390, %v436
        %v438 = vsub.f32 1.0, %v437
        %v439 = vmul.f32 %v436, %v438
        %v440 = vadd.f32 %v436, %v439
        %vm441 = vweird.f32 %v390
        %vm442 = vweird.f32 %v436
        %vm443 = vmor %vm441, %vm442
        %v444 = vsel %vm443, %v436, %v440
        %v445 = vand.u32 2147483647, %v390
        %vm446 = vcmp.eq.f32.partialorder %v445, 8.507059e+37
        %v447 = vand.u32 %v390, 2147483648
        %v448 = vor.u32 1.1754944e-38, %v447
        %v449 = vsel %vm446, %v448, %v444
        %v450 = vmul.f32 1.0, %v449
        %v451 = vtanh.pop %v255
        %v452 = vtanh.pop %v258
        %v453 = vtanh.pop %v261
        %v454 = vtanh.pop %v264
        %v455 = vmul.f32 %v405, %v451
        %v456 = vmul.f32 %v420, %v452
        %v457 = vmul.f32 %v435, %v453
        %v458 = vmul.f32 %v450, %v454
        %v459 = vtanh.pop %v455
        %v460 = vtanh.pop %v456
        %v461 = vtanh.pop %v457
        %v462 = vtanh.pop %v458
        %v463 = vmul.f32 %v329, %v459
        %v464 = vmul.f32 %v344, %v460
        %v465 = vmul.f32 %v359, %v461
        %v466 = vmul.f32 %v374, %v462
        %v467 = vld [vmem:[#allocation5 + $0x48] sm:$0xff]
        %v468 = vld [vmem:[#allocation5 + $0x50] sm:$0xff]
        %v469 = vld [vmem:[#allocation5 + $0x58] sm:$0x1]
        %v470 = vperm.slane %v469, 0
        %471 = vmatpush.xpose.msra.mxu0 0.0
        %472 = vmatpush.xpose.msra.mxu0 0.0
        %473 = vmatpush.xpose.msra.mxu0 0.0
        %474 = vmatpush.xpose.msra.mxu0 0.0
        %475 = vmatpush.xpose.msra.mxu0 0.0
        %476 = vmatpush.xpose.msra.mxu0 0.0
        %477 = vmatpush.xpose.msra.mxu0 0.0
        %478 = vmatpush.xpose.msra.mxu0 0.0
        %479 = vmatpush.xpose.msra.mxu0 0.0
        %480 = vmatpush.xpose.msra.mxu0 0.0
        %481 = vmatpush.xpose.msra.mxu0 0.0
        %482 = vmatpush.xpose.msra.mxu0 0.0
        %483 = vmatpush.xpose.msra.mxu0 0.0
        %484 = vmatpush.xpose.msra.mxu0 0.0
        %485 = vmatpush.xpose.msra.mxu0 %v468
        %486 = vmatpush.xpose.msra.mxu0 %v467
        %487 = vmatmul.f32.gmra.mxu0 %v463
        %v488 = vpop.f32.mrf.mxu0
        %v489 = vadd.f32 %v470, %v488
        %490 = vmatmul.f32.gmra.mxu0 %v464
        %v491 = vpop.f32.mrf.mxu0
        %v492 = vadd.f32 %v470, %v491
        %493 = vmatmul.f32.gmra.mxu0 %v465
        %v494 = vpop.f32.mrf.mxu0
        %v495 = vadd.f32 %v470, %v494
        %496 = vmatmul.f32.gmra.mxu0 %v466
        %v497 = vpop.f32.mrf.mxu0
        %v498 = vadd.f32 %v470, %v497
        %499 = vdwg.mxu0
        %v500 = vmul.f32 %v489, 0.5
        %v501 = vmul.f32 %v492, 0.5
        %v502 = vmul.f32 %v495, 0.5
        %v503 = vmul.f32 %v498, 0.5
        %v504 = vmul.f32 %v500, 1.442695
        %v505 = vpow.pop %v504
        %v506 = vmul.f32 %v501, 1.442695
        %v507 = vpow.pop %v506
        %v508 = vmul.f32 %v502, 1.442695
        %v509 = vpow.pop %v508
        %v510 = vmul.f32 %v503, 1.442695
        %v511 = vpow.pop %v510
        %516 = vrot.lane.b32.xlu0 %v505, 8
        %v517 = vpop.permute.xlu0 %516
        %518 = vrot.lane.b32.xlu0 %v507, 8
        %v519 = vpop.permute.xlu0 %518
        %520 = vrot.lane.b32.xlu0 %v509, 8
        %v521 = vpop.permute.xlu0 %520
        %522 = vrot.lane.b32.xlu0 %v511, 8
        %v523 = vpop.permute.xlu0 %522
        %v528 = vmul.f32 %v183, %v517
        %v529 = vmul.f32 %v184, %v519
        %v530 = vmul.f32 %v185, %v521
        %v531 = vmul.f32 %v186, %v523
        %536 = vrot.lane.b32.xlu0 %v528, 112
        %v537 = vpop.permute.xlu0 %536
        %538 = vrot.lane.b32.xlu0 %v529, 112
        %v539 = vpop.permute.xlu0 %538
        %540 = vrot.lane.b32.xlu0 %v530, 112
        %v541 = vpop.permute.xlu0 %540
        %542 = vrot.lane.b32.xlu0 %v531, 112
        %v543 = vpop.permute.xlu0 %542
        %v548 = vadd.f32 %v489, %v537
        %v549 = vadd.f32 %v492, %v539
        %v550 = vadd.f32 %v495, %v541
        %v551 = vadd.f32 %v498, %v543
        %v552 = vld [vmem:[#allocation5 + $0x60] sm:$0xff]
        %v553 = vld [vmem:[#allocation5 + $0x78] sm:$0x1]
        %v554 = vperm.slane %v553, 0
        %vm555 = vcmask 64512
        %v557 = vsel %vm555, %v548, 0
        %v560 = vsel %vm555, %v549, 0
        %v563 = vsel %vm555, %v550, 0
        %v566 = vsel %vm555, %v551, 0
        %568 = vmatpush.msra.mxu0 0.0
        %569 = vmatpush.msra.mxu0 0.0
        %570 = vmatpush.msra.mxu0 0.0
        %571 = vmatpush.msra.mxu0 0.0
        %572 = vmatpush.msra.mxu0 0.0
        %573 = vmatpush.msra.mxu0 0.0
        %574 = vmatpush.msra.mxu0 0.0
        %575 = vmatpush.msra.mxu0 0.0
        %576 = vmatpush.msra.mxu0 0.0
        %577 = vmatpush.msra.mxu0 0.0
        %578 = vmatpush.msra.mxu0 0.0
        %579 = vmatpush.msra.mxu0 0.0
        %580 = vmatpush.msra.mxu0 0.0
        %581 = vmatpush.msra.mxu0 0.0
        %582 = vmatpush.msra.mxu0 0.0
        %583 = vmatpush.msra.mxu0 %v552
        %584 = vmatmul.f32.gmra.mxu0 %v557
        %v585 = vpop.f32.mrf.mxu0
        %v586 = vadd.f32 %v554, %v585
        %587 = vmatmul.f32.gmra.mxu0 %v560
        %v588 = vpop.f32.mrf.mxu0
        %v589 = vadd.f32 %v554, %v588
        %590 = vmatmul.f32.gmra.mxu0 %v563
        %v591 = vpop.f32.mrf.mxu0
        %v592 = vadd.f32 %v554, %v591
        %593 = vmatmul.f32.gmra.mxu0 %v566
        %v594 = vpop.f32.mrf.mxu0
        %v595 = vadd.f32 %v554, %v594
        %596 = vdwg.mxu0
        %v597 = vld [vmem:[#allocation5 + $0x68] sm:$0xff]
        %v598 = vld [vmem:[#allocation5 + $0x80] sm:$0x1]
        %v599 = vperm.slane %v598, 0
        %600 = vmatpush.msra.mxu0 0.0
        %601 = vmatpush.msra.mxu0 0.0
        %602 = vmatpush.msra.mxu0 0.0
        %603 = vmatpush.msra.mxu0 0.0
        %604 = vmatpush.msra.mxu0 0.0
        %605 = vmatpush.msra.mxu0 0.0
        %606 = vmatpush.msra.mxu0 0.0
        %607 = vmatpush.msra.mxu0 0.0
        %608 = vmatpush.msra.mxu0 0.0
        %609 = vmatpush.msra.mxu0 0.0
        %610 = vmatpush.msra.mxu0 0.0
        %611 = vmatpush.msra.mxu0 0.0
        %612 = vmatpush.msra.mxu0 0.0
        %613 = vmatpush.msra.mxu0 0.0
        %614 = vmatpush.msra.mxu0 0.0
        %615 = vmatpush.msra.mxu0 %v597
        %616 = vmatmul.f32.gmra.mxu0 %v557
        %v617 = vpop.f32.mrf.mxu0
        %v618 = vadd.f32 %v599, %v617
        %619 = vmatmul.f32.gmra.mxu0 %v560
        %v620 = vpop.f32.mrf.mxu0
        %v621 = vadd.f32 %v599, %v620
        %622 = vmatmul.f32.gmra.mxu0 %v563
        %v623 = vpop.f32.mrf.mxu0
        %v624 = vadd.f32 %v599, %v623
        %625 = vmatmul.f32.gmra.mxu0 %v566
        %v626 = vpop.f32.mrf.mxu0
        %v627 = vadd.f32 %v599, %v626
        %628 = vdwg.mxu0
        %v629 = vld [vmem:[#allocation5 + $0x70] sm:$0xff]
        %v630 = vld [vmem:[#allocation5 + $0x88] sm:$0x1]
        %v631 = vperm.slane %v630, 0
        %632 = vmatpush.msra.mxu0 0.0
        %633 = vmatpush.msra.mxu0 0.0
        %634 = vmatpush.msra.mxu0 0.0
        %635 = vmatpush.msra.mxu0 0.0
        %636 = vmatpush.msra.mxu0 0.0
        %637 = vmatpush.msra.mxu0 0.0
        %638 = vmatpush.msra.mxu0 0.0
        %639 = vmatpush.msra.mxu0 0.0
        %640 = vmatpush.msra.mxu0 0.0
        %641 = vmatpush.msra.mxu0 0.0
        %642 = vmatpush.msra.mxu0 0.0
        %643 = vmatpush.msra.mxu0 0.0
        %644 = vmatpush.msra.mxu0 0.0
        %645 = vmatpush.msra.mxu0 0.0
        %646 = vmatpush.msra.mxu0 0.0
        %647 = vmatpush.msra.mxu0 %v629
        %648 = vmatmul.f32.gmra.mxu0 %v557
        %v649 = vpop.f32.mrf.mxu0
        %v650 = vadd.f32 %v631, %v649
        %651 = vmatmul.f32.gmra.mxu0 %v560
        %v652 = vpop.f32.mrf.mxu0
        %v653 = vadd.f32 %v631, %v652
        %654 = vmatmul.f32.gmra.mxu0 %v563
        %v655 = vpop.f32.mrf.mxu0
        %v656 = vadd.f32 %v631, %v655
        %657 = vmatmul.f32.gmra.mxu0 %v566
        %v658 = vpop.f32.mrf.mxu0
        %v659 = vadd.f32 %v631, %v658
        %660 = vdwg.mxu0
        %v661 = vxor.u32 %v650, 2147483648
        %v662 = vxor.u32 %v653, 2147483648
        %v663 = vxor.u32 %v656, 2147483648
        %v664 = vxor.u32 %v659, 2147483648
        %v665 = vmul.f32 %v661, 1.442695
        %v666 = vpow.pop %v665
        %v667 = vmul.f32 %v662, 1.442695
        %v668 = vpow.pop %v667
        %v669 = vmul.f32 %v663, 1.442695
        %v670 = vpow.pop %v669
        %v671 = vmul.f32 %v664, 1.442695
        %v672 = vpow.pop %v671
        %v673 = vadd.f32 %v666, 1.0
        %v674 = vadd.f32 %v668, 1.0
        %v675 = vadd.f32 %v670, 1.0
        %v676 = vadd.f32 %v672, 1.0
        %v677 = vrcp.pop %v673
        %v678 = vmul.f32 %v673, %v677
        %v679 = vsub.f32 1.0, %v678
        %v680 = vmul.f32 %v677, %v679
        %v681 = vadd.f32 %v677, %v680
        %vm682 = vweird.f32 %v673
        %vm683 = vweird.f32 %v677
        %vm684 = vmor %vm682, %vm683
        %v685 = vsel %vm684, %v677, %v681
        %v686 = vand.u32 2147483647, %v673
        %vm687 = vcmp.eq.f32.partialorder %v686, 8.507059e+37
        %v688 = vand.u32 %v673, 2147483648
        %v689 = vor.u32 1.1754944e-38, %v688
        %v690 = vsel %vm687, %v689, %v685
        %v691 = vmul.f32 1.0, %v690
        %v692 = vrcp.pop %v674
        %v693 = vmul.f32 %v674, %v692
        %v694 = vsub.f32 1.0, %v693
        %v695 = vmul.f32 %v692, %v694
        %v696 = vadd.f32 %v692, %v695
        %vm697 = vweird.f32 %v674
        %vm698 = vweird.f32 %v692
        %vm699 = vmor %vm697, %vm698
        %v700 = vsel %vm699, %v692, %v696
        %v701 = vand.u32 2147483647, %v674
        %vm702 = vcmp.eq.f32.partialorder %v701, 8.507059e+37
        %v703 = vand.u32 %v674, 2147483648
        %v704 = vor.u32 1.1754944e-38, %v703
        %v705 = vsel %vm702, %v704, %v700
        %v706 = vmul.f32 1.0, %v705
        %v707 = vrcp.pop %v675
        %v708 = vmul.f32 %v675, %v707
        %v709 = vsub.f32 1.0, %v708
        %v710 = vmul.f32 %v707, %v709
        %v711 = vadd.f32 %v707, %v710
        %vm712 = vweird.f32 %v675
        %vm713 = vweird.f32 %v707
        %vm714 = vmor %vm712, %vm713
        %v715 = vsel %vm714, %v707, %v711
        %v716 = vand.u32 2147483647, %v675
        %vm717 = vcmp.eq.f32.partialorder %v716, 8.507059e+37
        %v718 = vand.u32 %v675, 2147483648
        %v719 = vor.u32 1.1754944e-38, %v718
        %v720 = vsel %vm717, %v719, %v715
        %v721 = vmul.f32 1.0, %v720
        %v722 = vrcp.pop %v676
        %v723 = vmul.f32 %v676, %v722
        %v724 = vsub.f32 1.0, %v723
        %v725 = vmul.f32 %v722, %v724
        %v726 = vadd.f32 %v722, %v725
        %vm727 = vweird.f32 %v676
        %vm728 = vweird.f32 %v722
        %vm729 = vmor %vm727, %vm728
        %v730 = vsel %vm729, %v722, %v726
        %v731 = vand.u32 2147483647, %v676
        %vm732 = vcmp.eq.f32.partialorder %v731, 8.507059e+37
        %v733 = vand.u32 %v676, 2147483648
        %v734 = vor.u32 1.1754944e-38, %v733
        %v735 = vsel %vm732, %v734, %v730
        %v736 = vmul.f32 1.0, %v735
        %v737 = vxor.u32 %v586, 2147483648
        %v738 = vxor.u32 %v589, 2147483648
        %v739 = vxor.u32 %v592, 2147483648
        %v740 = vxor.u32 %v595, 2147483648
        %v741 = vmul.f32 %v737, 1.442695
        %v742 = vpow.pop %v741
        %v743 = vmul.f32 %v738, 1.442695
        %v744 = vpow.pop %v743
        %v745 = vmul.f32 %v739, 1.442695
        %v746 = vpow.pop %v745
        %v747 = vmul.f32 %v740, 1.442695
        %v748 = vpow.pop %v747
        %v749 = vadd.f32 %v742, 1.0
        %v750 = vadd.f32 %v744, 1.0
        %v751 = vadd.f32 %v746, 1.0
        %v752 = vadd.f32 %v748, 1.0
        %v753 = vrcp.pop %v749
        %v754 = vmul.f32 %v749, %v753
        %v755 = vsub.f32 1.0, %v754
        %v756 = vmul.f32 %v753, %v755
        %v757 = vadd.f32 %v753, %v756
        %vm758 = vweird.f32 %v749
        %vm759 = vweird.f32 %v753
        %vm760 = vmor %vm758, %vm759
        %v761 = vsel %vm760, %v753, %v757
        %v762 = vand.u32 2147483647, %v749
        %vm763 = vcmp.eq.f32.partialorder %v762, 8.507059e+37
        %v764 = vand.u32 %v749, 2147483648
        %v765 = vor.u32 1.1754944e-38, %v764
        %v766 = vsel %vm763, %v765, %v761
        %v767 = vmul.f32 1.0, %v766
        %v768 = vrcp.pop %v750
        %v769 = vmul.f32 %v750, %v768
        %v770 = vsub.f32 1.0, %v769
        %v771 = vmul.f32 %v768, %v770
        %v772 = vadd.f32 %v768, %v771
        %vm773 = vweird.f32 %v750
        %vm774 = vweird.f32 %v768
        %vm775 = vmor %vm773, %vm774
        %v776 = vsel %vm775, %v768, %v772
        %v777 = vand.u32 2147483647, %v750
        %vm778 = vcmp.eq.f32.partialorder %v777, 8.507059e+37
        %v779 = vand.u32 %v750, 2147483648
        %v780 = vor.u32 1.1754944e-38, %v779
        %v781 = vsel %vm778, %v780, %v776
        %v782 = vmul.f32 1.0, %v781
        %v783 = vrcp.pop %v751
        %v784 = vmul.f32 %v751, %v783
        %v785 = vsub.f32 1.0, %v784
        %v786 = vmul.f32 %v783, %v785
        %v787 = vadd.f32 %v783, %v786
        %vm788 = vweird.f32 %v751
        %vm789 = vweird.f32 %v783
        %vm790 = vmor %vm788, %vm789
        %v791 = vsel %vm790, %v783, %v787
        %v792 = vand.u32 2147483647, %v751
        %vm793 = vcmp.eq.f32.partialorder %v792, 8.507059e+37
        %v794 = vand.u32 %v751, 2147483648
        %v795 = vor.u32 1.1754944e-38, %v794
        %v796 = vsel %vm793, %v795, %v791
        %v797 = vmul.f32 1.0, %v796
        %v798 = vrcp.pop %v752
        %v799 = vmul.f32 %v752, %v798
        %v800 = vsub.f32 1.0, %v799
        %v801 = vmul.f32 %v798, %v800
        %v802 = vadd.f32 %v798, %v801
        %vm803 = vweird.f32 %v752
        %vm804 = vweird.f32 %v798
        %vm805 = vmor %vm803, %vm804
        %v806 = vsel %vm805, %v798, %v802
        %v807 = vand.u32 2147483647, %v752
        %vm808 = vcmp.eq.f32.partialorder %v807, 8.507059e+37
        %v809 = vand.u32 %v752, 2147483648
        %v810 = vor.u32 1.1754944e-38, %v809
        %v811 = vsel %vm808, %v810, %v806
        %v812 = vmul.f32 1.0, %v811
        %v813 = vtanh.pop %v618
        %v814 = vtanh.pop %v621
        %v815 = vtanh.pop %v624
        %v816 = vtanh.pop %v627
        %v817 = vmul.f32 %v767, %v813
        %v818 = vmul.f32 %v782, %v814
        %v819 = vmul.f32 %v797, %v815
        %v820 = vmul.f32 %v812, %v816
        %v821 = vtanh.pop %v817
        %v822 = vtanh.pop %v818
        %v823 = vtanh.pop %v819
        %v824 = vtanh.pop %v820
        %v825 = vmul.f32 %v691, %v821
        %v826 = vmul.f32 %v706, %v822
        %v827 = vmul.f32 %v721, %v823
        %v828 = vmul.f32 %v736, %v824
        %829 = vst [vmem:[%s180] sm:$0xff] %v825
        %830 = vst [vmem:[%s180 + $0x10] sm:$0xff] %v826
        %831 = vst [vmem:[%s180 + $0x20] sm:$0xff] %v827
        %832 = vst [vmem:[%s180 + $0x30] sm:$0xff] %v828
        %v833 = vsel %vm191, %v489, 0.0
        %v834 = vsel %vm191, %v492, 0.0
        %v835 = vsel %vm191, %v495, 0.0
        %v836 = vsel %vm191, %v498, 0.0
        %837 = vst [vmem:[%s180 + $0x8] sm:$0xff] %v833
        %838 = vst [vmem:[%s180 + $0x18] sm:$0xff] %v834
        %839 = vst [vmem:[%s180 + $0x28] sm:$0xff] %v835
        %840 = vst [vmem:[%s180 + $0x38] sm:$0xff] %v836
        %s841 = sand.u32 %s75, 1
        %s842 = scalar_lea.sflag [#allocation4], %s841
        %s843 = sand.u32 %s75, 1
        %s844 = smul.addr %s843, 64
        %s845 = scalar_lea.vmem [#allocation7], %s844
        // Predicated region
        $region37: #{tpu_custom_call.1} parent=27 // pred_check
          %p846 = pneg %p85
        $region38: #{tpu_custom_call.1} parent=27 // pred_check_branch
          %848 = sbr.rel (%p846) target = $region40
        $region39: #{tpu_custom_call.1} parent=27 // pred_region
          %s849 = smul.u32 4, %s20
          %851 = vsyncadd %s842, 0
          %s852 = smul.addr %s849, 2
          %s853 = smul.addr %s852, 8
          %s854 = scalar_lea.hbm %s2, %s853
          %s855 = sshll.u32 %s845, 4
          %s856 = int_to_ptr.vmem [resolvable:$true] %s855
          %s857 = sshll.u32 %s854, 4
          %s858 = int_to_ptr.hbm [resolvable:$true] %s857
          %863 = dma.vmem_to_hbm [thread:$0]  %s856, 1024, %s858, %s842, 256, 256, 16
        $region40: #{tpu_custom_call.1} parent=27 // pred_fallthru
          _
      $region28: #{tpu_custom_call.1} parent=5 // pred_fallthru
        _
      %p864 = scmp.le.s32.totalorder 2, %s15
      // Predicated region
      $region41: #{tpu_custom_call.1} parent=5 // pred_check
        %p865 = pneg %p864
      $region42: #{tpu_custom_call.1} parent=5 // pred_check_branch
        %867 = sbr.rel (%p865) target = $region44
      $region43: #{tpu_custom_call.1} parent=5 // pred_region
        %s868 = ssub.s32 %s15, 2
        // Predicated region
        $region45: #{tpu_custom_call.1} parent=43 // pred_check
          %p869 = pneg %p91
        $region46: #{tpu_custom_call.1} parent=43 // pred_check_branch
          %871 = sbr.rel (%p869) target = $region48
        $region47: #{tpu_custom_call.1} parent=43 // pred_region
          %s872 = sand.u32 %s76, 1
          %s873 = scalar_lea.sflag [#allocation4], %s872
          %s874 = sand.u32 %s76, 1
          %s875 = smul.addr %s874, 64
          %s876 = scalar_lea.vmem [#allocation7], %s875
          %878 = dma.done %s873, 1024
        $region48: #{tpu_custom_call.1} parent=43 // pred_fallthru
          _
      $region44: #{tpu_custom_call.1} parent=5 // pred_fallthru
        _
    $region6: #{tpu_custom_call.1} parent=1 // loop_footer
      %s19 = sadd.s32 1, %s15
    $region7: #{tpu_custom_call.1} parent=1 // loop_footer_branch
      %14 = sbr.rel target = $region3
    $region8: #{tpu_custom_call.1} parent=1 // loop_exit
      _
    %879 = vsyncpa [#allocation3], 1
    %s880 = scalar_lea.sflag [#allocation3], 1
    %881 = vsyncpa %s880, 1
    %882 = vsyncpa [#allocation6], 1
    %883 = vsyncpa [#allocation4], 1
    %s884 = scalar_lea.sflag [#allocation4], 1
    %885 = vsyncpa %s884, 1

</llo_original>
